<compile_context>
chip_gen: v5e
topology: v5e:2x2
jax: 0.10.0
libtpu: 0.0.40
codegen_flags: <defaults>
</compile_context>

<pallas_src>
import functools

import jax
import jax.numpy as jnp
from jax import lax
from jax.experimental import pallas as pl
from jax.experimental.pallas import tpu as pltpu


# ---------------------------------------------------------------------------
# Fused kernel: projections + multi-head attention + final linear + residual +
# LayerNorm.  One grid step per BATCH BLOCK of `bt` elements.
# ---------------------------------------------------------------------------
def _fused_attention_kernel(mem_ref, dec_ref, wkv_ref, wqr_ref, w2_ref,
                            b_ref, g_ref, beta_ref, out_ref, attn_ref,
                            *, bt, h, d, seq_q, seq_k, scale):
    H = h * d
    cdt = wkv_ref.dtype                      # MXU input dtype (f32 or bf16)

    # Leading-dim merges only (free).
    mem2d = mem_ref[...].reshape(bt * seq_k, H)
    dec2d = dec_ref[...].reshape(bt * seq_q, H)

    mk = (((1,), (0,)), ((), ()))            # (M,K) @ (K,N)

    # Fused projections: one wide matmul per input tensor.
    #   kv = [ K | V ]      qr = [ Q | dec @ W1 ]
    kv = lax.dot_general(mem2d.astype(cdt), wkv_ref[...], mk,
                         preferred_element_type=jnp.float32)    # (bt*seq_k, 2H)
    qr = lax.dot_general(dec2d.astype(cdt), wqr_ref[...], mk,
                         preferred_element_type=jnp.float32)    # (bt*seq_q, 2H)
    y_dec = qr[:, H:]                        # first half of final_linear output

    # Head-major stacking: lane slices + leading-axis concat/reshape only.
    # (bt*seq, ·) -> (bt, h, seq, d) -> (bt*h, seq, d), group index g = b*h + j.
    def heads(x2d, col0, seq):
        parts = [x2d[:, col0 + j * d: col0 + (j + 1) * d].reshape(bt, 1, seq, d)
                 for j in range(h)]
        return jnp.concatenate(parts, axis=1).reshape(bt * h, seq, d)

    qh = heads(qr, 0, seq_q)
    kh = heads(kv, 0, seq_k)
    vh = heads(kv, H, seq_k)

    # One batched contraction for all (batch, head) pairs.
    # (K is contracted on its last dim; producing K^T per head only matters at
    #  large seq_k — negligible at seq_k = 8.)
    scores = jnp.einsum('gqd,gkd->gqk', qh.astype(cdt), kh.astype(cdt),
                        preferred_element_type=jnp.float32) * scale

    # Exact softmax in f32 (matches torch.softmax; no approx reciprocal).
    m = jnp.max(scores, axis=-1, keepdims=True)
    e = jnp.exp(scores - m)
    p = e / jnp.sum(e, axis=-1, keepdims=True)            # (bt*h, seq_q, seq_k)

    # Single stacked, batch-major store of the attention probabilities.
    attn_ref[...] = p.reshape(bt, h, seq_q, seq_k)

    ctx = jnp.einsum('gqk,gkd->gqd', p.astype(cdt), vh.astype(cdt),
                     preferred_element_type=jnp.float32)  # (bt*h, seq_q, d)

    # Back to (bt*seq_q, H) with head-major features
    # (== torch .view(h,B,sq,d).permute(1,2,0,3).view(B,sq,h*d)).
    ctx4 = ctx.reshape(bt, h, seq_q, d)
    x2d = jnp.concatenate([ctx4[:, j] for j in range(h)],
                          axis=-1).reshape(bt * seq_q, H)

    # Second half of final_linear + bias + residual.
    y = y_dec + lax.dot_general(x2d.astype(cdt), w2_ref[...], mk,
                                preferred_element_type=jnp.float32)
    y = y + b_ref[...] + dec2d

    # LayerNorm (eps=1e-5, biased variance) — f32 VPU/EUP math.
    mean = jnp.mean(y, axis=-1, keepdims=True)
    var = jnp.mean((y - mean) ** 2, axis=-1, keepdims=True)
    yn = (y - mean) * lax.rsqrt(var + 1e-5)
    out_ref[...] = (yn * g_ref[...] + beta_ref[...]).reshape(bt, seq_q, H)


# ---------------------------------------------------------------------------
# Wrapper
# ---------------------------------------------------------------------------
def _pick_batch_tile(B, seq_q, seq_k, batch_tile):
    if batch_tile is not None:
        assert B % batch_tile == 0
        return batch_tile
    # Fold batch until the matmul M dim is a few hundred rows.
    # (On v7x you may prefer >= 2 grid steps: pass batch_tile=B//2 explicitly.)
    target = max(1, 256 // max(seq_q, seq_k, 1))
    bt = 1
    for c in range(1, B + 1):
        if B % c == 0 and c <= target:
            bt = c
    return bt


@functools.partial(jax.jit,
                   static_argnames=("num_hidden", "h", "use_bf16_mxu", "batch_tile"))
def attention_forward(params, memory, decoder_input, num_hidden, h,
                      use_bf16_mxu=False, batch_tile=None):
    B, seq_k, H = memory.shape
    _, seq_q, _ = decoder_input.shape
    assert H == num_hidden and num_hidden % h == 0
    d = num_hidden // h
    scale = 1.0 / float(d) ** 0.5
    bt = _pick_batch_tile(B, seq_q, seq_k, batch_tile)

    # One-time layout prep (XLA, outside the kernel).
    # PyTorch Linear weights are (out, in); transpose to (in, out) and fuse:
    #   W_kv = [Wk^T | Wv^T]   (H, 2H)   acts on memory
    #   W_qr = [Wq^T | W1^T]   (H, 2H)   acts on decoder_input (W1 = final[:, :H])
    #   W2   = final[:, H:]^T  (H,  H)   acts on the attention output
    wdt = jnp.bfloat16 if use_bf16_mxu else jnp.float32
    w_kv = jnp.concatenate([params["w_key"].T, params["w_value"].T], axis=1).astype(wdt)
    w_qr = jnp.concatenate([params["w_query"].T, params["w_final"][:, :H].T],
                           axis=1).astype(wdt)
    w2 = params["w_final"][:, H:].T.astype(wdt)
    b2 = params["b_final"].reshape(1, H).astype(jnp.float32)
    g2 = params["ln_gamma"].reshape(1, H).astype(jnp.float32)
    be2 = params["ln_beta"].reshape(1, H).astype(jnp.float32)

    kernel = functools.partial(_fused_attention_kernel, bt=bt, h=h, d=d,
                               seq_q=seq_q, seq_k=seq_k, scale=scale)

    # Explicit VMEM budget (blocks are double-buffered; weights are resident).
    w_itemsize = 2 if use_bf16_mxu else 4
    block_bytes = 4 * (bt * seq_k * H + 2 * bt * seq_q * H + bt * h * seq_q * seq_k)
    weight_bytes = 5 * H * H * w_itemsize + 3 * H * 4
    vmem_limit = int(min(64 * 1024 * 1024,
                         max(32 * 1024 * 1024, 4 * (block_bytes + weight_bytes))))

    wspec2 = pl.BlockSpec((H, 2 * H), lambda i: (0, 0))     # fused weights (resident)
    wspec1 = pl.BlockSpec((H, H), lambda i: (0, 0))
    vspec = pl.BlockSpec((1, H), lambda i: (0, 0))          # bias / gamma / beta

    out, attn_bh = pl.pallas_call(
        kernel,
        grid=(B // bt,),
        in_specs=[
            pl.BlockSpec((bt, seq_k, H), lambda i: (i, 0, 0)),   # memory block
            pl.BlockSpec((bt, seq_q, H), lambda i: (i, 0, 0)),   # decoder block
            wspec2, wspec2, wspec1,                              # W_kv, W_qr, W2
            vspec, vspec, vspec,                                 # b, gamma, beta
        ],
        out_specs=(
            pl.BlockSpec((bt, seq_q, H), lambda i: (i, 0, 0)),
            pl.BlockSpec((bt, h, seq_q, seq_k), lambda i: (i, 0, 0, 0)),
        ),
        out_shape=(
            jax.ShapeDtypeStruct((B, seq_q, H), jnp.float32),
            jax.ShapeDtypeStruct((B, h, seq_q, seq_k), jnp.float32),
        ),
        compiler_params=pltpu.CompilerParams(
            dimension_semantics=("parallel",),
            vmem_limit_bytes=vmem_limit),
    )(memory, decoder_input, w_kv, w_qr, w2, b2, g2, be2)

    # Batch-major HBM layout -> PyTorch's head-major (h*B, seq_q, seq_k).
    attns = jnp.transpose(attn_bh, (1, 0, 2, 3)).reshape(h * B, seq_q, seq_k)
    return out, attns


# ---------------------------------------------------------------------------
# Pure-JAX reference (mirrors the PyTorch module) and parameter construction.
# ---------------------------------------------------------------------------
def attention_reference(params, memory, decoder_input, num_hidden, h):
    B, seq_k, H = memory.shape
    seq_q = decoder_input.shape[1]
    d = H // h
    K = memory @ params["w_key"].T
    V = memory @ params["w_value"].T
    Q = decoder_input @ params["w_query"].T

    def split(x, S):
        return x.reshape(B, S, h, d).transpose(2, 0, 1, 3).reshape(h * B, S, d)

    K, V, Q = split(K, seq_k), split(V, seq_k), split(Q, seq_q)
    attn = (Q @ jnp.swapaxes(K, 1, 2)) / (d ** 0.5)
    attn = jax.nn.softmax(attn, axis=-1)
    x = attn @ V
    x = x.reshape(h, B, seq_q, d).transpose(1, 2, 0, 3).reshape(B, seq_q, H)
    cat = jnp.concatenate([decoder_input, x], axis=-1)
    y = cat @ params["w_final"].T + params["b_final"]
    y = y + decoder_input
    mean = y.mean(-1, keepdims=True)
    var = ((y - mean) ** 2).mean(-1, keepdims=True)
    y = (y - mean) / jnp.sqrt(var + 1e-5)
    y = y * params["ln_gamma"] + params["ln_beta"]
    return y, attn


def make_params(key, num_hidden):
    ks = jax.random.split(key, 5)
    s = 0.1
    return {
        "w_key": s * jax.random.normal(ks[0], (num_hidden, num_hidden), jnp.float32),
        "w_value": s * jax.random.normal(ks[1], (num_hidden, num_hidden), jnp.float32),
        "w_query": s * jax.random.normal(ks[2], (num_hidden, num_hidden), jnp.float32),
        "w_final": s * jax.random.normal(ks[3], (num_hidden, 2 * num_hidden), jnp.float32),
        "b_final": s * jax.random.normal(ks[4], (num_hidden,), jnp.float32),
        "ln_gamma": jnp.ones((num_hidden,), jnp.float32),
        "ln_beta": jnp.zeros((num_hidden,), jnp.float32),
    }


if __name__ == "__main__":
    B, seq_k, seq_q = 2, 8, 8
    num_hidden, h = 32, 4

    key = jax.random.PRNGKey(0)
    kp, km, kd = jax.random.split(key, 3)
    params = make_params(kp, num_hidden)
    memory = jax.random.normal(km, (B, seq_k, num_hidden), jnp.float32)
    decoder_input = jax.random.normal(kd, (B, seq_q, num_hidden), jnp.float32)

    # f32 MXU path (exact-parity mode).
    out, attns = attention_forward(params, memory, decoder_input, num_hidden, h)
    out = jax.block_until_ready(out)
    attns = jax.block_until_ready(attns)

    assert out.shape == (B, seq_q, num_hidden)
    assert attns.shape == (h * B, seq_q, seq_k)
    assert bool(jnp.all(jnp.isfinite(out))) and bool(jnp.all(jnp.isfinite(attns)))

    ref_out, ref_attns = attention_reference(params, memory, decoder_input, num_hidden, h)
    assert float(jnp.max(jnp.abs(out - ref_out))) < 5e-2
    assert float(jnp.max(jnp.abs(attns - ref_attns))) < 5e-2

    # bf16-MXU path (v6e/v7x knob): same semantics, bf16 matmul inputs.
    out_bf, attns_bf = attention_forward(params, memory, decoder_input,
                                         num_hidden, h, use_bf16_mxu=True)
    out_bf = jax.block_until_ready(out_bf)
    attns_bf = jax.block_until_ready(attns_bf)
    assert out_bf.shape == (B, seq_q, num_hidden)
    assert bool(jnp.all(jnp.isfinite(out_bf))) and bool(jnp.all(jnp.isfinite(attns_bf)))
    assert float(jnp.max(jnp.abs(out_bf - ref_out))) < 1e-1

    print("KERNEL_OK")
</pallas_src>

<mosaic_0001>
module attributes {stable_mosaic.version = 11 : i64} {
  func.func @_fused_attention_kernel(%arg0: i32, %arg1: memref<2x8x32xf32, #tpu.memory_space<vmem>>, %arg2: memref<2x8x32xf32, #tpu.memory_space<vmem>>, %arg3: memref<32x64xf32, #tpu.memory_space<vmem>>, %arg4: memref<32x64xf32, #tpu.memory_space<vmem>>, %arg5: memref<32x32xf32, #tpu.memory_space<vmem>>, %arg6: memref<1x32xf32, #tpu.memory_space<vmem>>, %arg7: memref<1x32xf32, #tpu.memory_space<vmem>>, %arg8: memref<1x32xf32, #tpu.memory_space<vmem>>, %arg9: memref<2x8x32xf32, #tpu.memory_space<vmem>>, %arg10: memref<2x4x8x8xf32, #tpu.memory_space<vmem>>) attributes {dimension_semantics = [#tpu.dimension_semantics<parallel>], iteration_bounds = array<i64: 1>, scalar_prefetch = 0 : i64, scratch_operands = 0 : i64, tpu.core_type = #tpu.core_type<tc>, window_params = [{transform_indices = @transform_0, window_bounds = array<i64: 2, 8, 32>}, {transform_indices = @transform_1, window_bounds = array<i64: 2, 8, 32>}, {pipeline_mode = #tpu.pipeline_mode<synchronous>, transform_indices = @transform_2, window_bounds = array<i64: 32, 64>}, {pipeline_mode = #tpu.pipeline_mode<synchronous>, transform_indices = @transform_3, window_bounds = array<i64: 32, 64>}, {pipeline_mode = #tpu.pipeline_mode<synchronous>, transform_indices = @transform_4, window_bounds = array<i64: 32, 32>}, {pipeline_mode = #tpu.pipeline_mode<synchronous>, transform_indices = @transform_5, window_bounds = array<i64: 1, 32>}, {pipeline_mode = #tpu.pipeline_mode<synchronous>, transform_indices = @transform_6, window_bounds = array<i64: 1, 32>}, {pipeline_mode = #tpu.pipeline_mode<synchronous>, transform_indices = @transform_7, window_bounds = array<i64: 1, 32>}, {transform_indices = @transform_8, window_bounds = array<i64: 2, 8, 32>}, {transform_indices = @transform_9, window_bounds = array<i64: 2, 4, 8, 8>}]} {
    %c0 = arith.constant 0 : index
    %c0_0 = arith.constant 0 : index
    %c0_1 = arith.constant 0 : index
    %0 = vector.load %arg1[%c0, %c0_0, %c0_1] : memref<2x8x32xf32, #tpu.memory_space<vmem>>, vector<2x8x32xf32>
    %1 = vector.shape_cast %0 : vector<2x8x32xf32> to vector<16x32xf32>
    %c0_2 = arith.constant 0 : index
    %c0_3 = arith.constant 0 : index
    %c0_4 = arith.constant 0 : index
    %2 = vector.load %arg2[%c0_2, %c0_3, %c0_4] : memref<2x8x32xf32, #tpu.memory_space<vmem>>, vector<2x8x32xf32>
    %3 = vector.shape_cast %2 : vector<2x8x32xf32> to vector<16x32xf32>
    %c0_5 = arith.constant 0 : index
    %c0_6 = arith.constant 0 : index
    %4 = vector.load %arg3[%c0_5, %c0_6] : memref<32x64xf32, #tpu.memory_space<vmem>>, vector<32x64xf32>
    %cst = arith.constant dense<0.000000e+00> : vector<16x64xf32>
    %5 = tpu.matmul %1, %4, %cst {dimension_numbers = #tpu.dot_dimension_numbers<[1], [0], [0], [1], [0, 0, 1, 1], [], []>} : vector<16x32xf32>, vector<32x64xf32>, vector<16x64xf32> -> vector<16x64xf32>
    %c0_7 = arith.constant 0 : index
    %c0_8 = arith.constant 0 : index
    %6 = vector.load %arg4[%c0_7, %c0_8] : memref<32x64xf32, #tpu.memory_space<vmem>>, vector<32x64xf32>
    %cst_9 = arith.constant dense<0.000000e+00> : vector<16x64xf32>
    %7 = tpu.matmul %3, %6, %cst_9 {dimension_numbers = #tpu.dot_dimension_numbers<[1], [0], [0], [1], [0, 0, 1, 1], [], []>} : vector<16x32xf32>, vector<32x64xf32>, vector<16x64xf32> -> vector<16x64xf32>
    %8 = vector.extract_strided_slice %7 {offsets = [0, 32], sizes = [16, 32], strides = [1, 1]} : vector<16x64xf32> to vector<16x32xf32>
    %9 = vector.extract_strided_slice %7 {offsets = [0, 0], sizes = [16, 8], strides = [1, 1]} : vector<16x64xf32> to vector<16x8xf32>
    %10 = vector.shape_cast %9 : vector<16x8xf32> to vector<2x1x8x8xf32>
    %11 = vector.extract_strided_slice %7 {offsets = [0, 8], sizes = [16, 8], strides = [1, 1]} : vector<16x64xf32> to vector<16x8xf32>
    %12 = vector.shape_cast %11 : vector<16x8xf32> to vector<2x1x8x8xf32>
    %13 = vector.extract_strided_slice %7 {offsets = [0, 16], sizes = [16, 8], strides = [1, 1]} : vector<16x64xf32> to vector<16x8xf32>
    %14 = vector.shape_cast %13 : vector<16x8xf32> to vector<2x1x8x8xf32>
    %15 = vector.extract_strided_slice %7 {offsets = [0, 24], sizes = [16, 8], strides = [1, 1]} : vector<16x64xf32> to vector<16x8xf32>
    %16 = vector.shape_cast %15 : vector<16x8xf32> to vector<2x1x8x8xf32>
    %17 = tpu.concatenate %10, %12, %14, %16 in 1 : vector<2x1x8x8xf32>, vector<2x1x8x8xf32>, vector<2x1x8x8xf32>, vector<2x1x8x8xf32> -> vector<2x4x8x8xf32>
    %18 = vector.shape_cast %17 : vector<2x4x8x8xf32> to vector<8x8x8xf32>
    %19 = vector.extract_strided_slice %5 {offsets = [0, 0], sizes = [16, 8], strides = [1, 1]} : vector<16x64xf32> to vector<16x8xf32>
    %20 = vector.shape_cast %19 : vector<16x8xf32> to vector<2x1x8x8xf32>
    %21 = vector.extract_strided_slice %5 {offsets = [0, 8], sizes = [16, 8], strides = [1, 1]} : vector<16x64xf32> to vector<16x8xf32>
    %22 = vector.shape_cast %21 : vector<16x8xf32> to vector<2x1x8x8xf32>
    %23 = vector.extract_strided_slice %5 {offsets = [0, 16], sizes = [16, 8], strides = [1, 1]} : vector<16x64xf32> to vector<16x8xf32>
    %24 = vector.shape_cast %23 : vector<16x8xf32> to vector<2x1x8x8xf32>
    %25 = vector.extract_strided_slice %5 {offsets = [0, 24], sizes = [16, 8], strides = [1, 1]} : vector<16x64xf32> to vector<16x8xf32>
    %26 = vector.shape_cast %25 : vector<16x8xf32> to vector<2x1x8x8xf32>
    %27 = tpu.concatenate %20, %22, %24, %26 in 1 : vector<2x1x8x8xf32>, vector<2x1x8x8xf32>, vector<2x1x8x8xf32>, vector<2x1x8x8xf32> -> vector<2x4x8x8xf32>
    %28 = vector.shape_cast %27 : vector<2x4x8x8xf32> to vector<8x8x8xf32>
    %29 = vector.extract_strided_slice %5 {offsets = [0, 32], sizes = [16, 8], strides = [1, 1]} : vector<16x64xf32> to vector<16x8xf32>
    %30 = vector.shape_cast %29 : vector<16x8xf32> to vector<2x1x8x8xf32>
    %31 = vector.extract_strided_slice %5 {offsets = [0, 40], sizes = [16, 8], strides = [1, 1]} : vector<16x64xf32> to vector<16x8xf32>
    %32 = vector.shape_cast %31 : vector<16x8xf32> to vector<2x1x8x8xf32>
    %33 = vector.extract_strided_slice %5 {offsets = [0, 48], sizes = [16, 8], strides = [1, 1]} : vector<16x64xf32> to vector<16x8xf32>
    %34 = vector.shape_cast %33 : vector<16x8xf32> to vector<2x1x8x8xf32>
    %35 = vector.extract_strided_slice %5 {offsets = [0, 56], sizes = [16, 8], strides = [1, 1]} : vector<16x64xf32> to vector<16x8xf32>
    %36 = vector.shape_cast %35 : vector<16x8xf32> to vector<2x1x8x8xf32>
    %37 = tpu.concatenate %30, %32, %34, %36 in 1 : vector<2x1x8x8xf32>, vector<2x1x8x8xf32>, vector<2x1x8x8xf32>, vector<2x1x8x8xf32> -> vector<2x4x8x8xf32>
    %38 = vector.shape_cast %37 : vector<2x4x8x8xf32> to vector<8x8x8xf32>
    "tpu.trace_start"() <{level = 10 : i32, message = "gqd,gkd->gqk"}> : () -> ()
    %cst_10 = arith.constant dense<0.000000e+00> : vector<8x8x8xf32>
    %39 = tpu.matmul %18, %28, %cst_10 {dimension_numbers = #tpu.dot_dimension_numbers<[2], [2], [1], [1], [0, 0, 0, 1, 1, 1], [0], [0]>} : vector<8x8x8xf32>, vector<8x8x8xf32>, vector<8x8x8xf32> -> vector<8x8x8xf32>
    "tpu.trace_stop"() : () -> ()
    %cst_11 = arith.constant 0.353553385 : f32
    %40 = vector.broadcast %cst_11 : f32 to vector<8x8x8xf32>
    %41 = arith.mulf %39, %40 : vector<8x8x8xf32>
    %cst_12 = arith.constant dense<0xFF800000> : vector<8x8xf32>
    %42 = vector.multi_reduction <maximumf>, %41, %cst_12 [2] : vector<8x8x8xf32> to vector<8x8xf32>
    %43 = vector.shape_cast %42 : vector<8x8xf32> to vector<8x8x1xf32>
    %44 = vector.broadcast %43 : vector<8x8x1xf32> to vector<8x8x8xf32>
    %45 = arith.subf %41, %44 : vector<8x8x8xf32>
    %46 = math.exp %45 : vector<8x8x8xf32>
    %cst_13 = arith.constant dense<0.000000e+00> : vector<8x8xf32>
    %47 = vector.multi_reduction <add>, %46, %cst_13 [2] : vector<8x8x8xf32> to vector<8x8xf32>
    %48 = vector.shape_cast %47 : vector<8x8xf32> to vector<8x8x1xf32>
    %49 = vector.broadcast %48 : vector<8x8x1xf32> to vector<8x8x8xf32>
    %50 = arith.divf %46, %49 : vector<8x8x8xf32>
    %51 = vector.shape_cast %50 : vector<8x8x8xf32> to vector<2x4x8x8xf32>
    %c0_14 = arith.constant 0 : index
    %c0_15 = arith.constant 0 : index
    %c0_16 = arith.constant 0 : index
    %c0_17 = arith.constant 0 : index
    %52 = vector.load %arg10[%c0_14, %c0_15, %c0_16, %c0_17] : memref<2x4x8x8xf32, #tpu.memory_space<vmem>>, vector<2x4x8x8xf32>
    tpu.vector_store %arg10[%c0_14, %c0_15, %c0_16, %c0_17], %51 {strides = array<i32>} : memref<2x4x8x8xf32, #tpu.memory_space<vmem>>, vector<2x4x8x8xf32>,
    "tpu.trace_start"() <{level = 10 : i32, message = "gqk,gkd->gqd"}> : () -> ()
    %cst_18 = arith.constant dense<0.000000e+00> : vector<8x8x8xf32>
    %53 = tpu.matmul %50, %38, %cst_18 {dimension_numbers = #tpu.dot_dimension_numbers<[2], [1], [1], [2], [0, 0, 0, 1, 1, 2], [0], [0]>} : vector<8x8x8xf32>, vector<8x8x8xf32>, vector<8x8x8xf32> -> vector<8x8x8xf32>
    "tpu.trace_stop"() : () -> ()
    %54 = vector.shape_cast %53 : vector<8x8x8xf32> to vector<2x4x8x8xf32>
    %55 = vector.extract_strided_slice %54 {offsets = [0, 0, 0, 0], sizes = [2, 1, 8, 8], strides = [1, 1, 1, 1]} : vector<2x4x8x8xf32> to vector<2x1x8x8xf32>
    %56 = vector.shape_cast %55 : vector<2x1x8x8xf32> to vector<2x8x8xf32>
    %57 = vector.extract_strided_slice %54 {offsets = [0, 1, 0, 0], sizes = [2, 1, 8, 8], strides = [1, 1, 1, 1]} : vector<2x4x8x8xf32> to vector<2x1x8x8xf32>
    %58 = vector.shape_cast %57 : vector<2x1x8x8xf32> to vector<2x8x8xf32>
    %59 = vector.extract_strided_slice %54 {offsets = [0, 2, 0, 0], sizes = [2, 1, 8, 8], strides = [1, 1, 1, 1]} : vector<2x4x8x8xf32> to vector<2x1x8x8xf32>
    %60 = vector.shape_cast %59 : vector<2x1x8x8xf32> to vector<2x8x8xf32>
    %61 = vector.extract_strided_slice %54 {offsets = [0, 3, 0, 0], sizes = [2, 1, 8, 8], strides = [1, 1, 1, 1]} : vector<2x4x8x8xf32> to vector<2x1x8x8xf32>
    %62 = vector.shape_cast %61 : vector<2x1x8x8xf32> to vector<2x8x8xf32>
    %63 = tpu.concatenate %56, %58, %60, %62 in 2 : vector<2x8x8xf32>, vector<2x8x8xf32>, vector<2x8x8xf32>, vector<2x8x8xf32> -> vector<2x8x32xf32>
    %64 = vector.shape_cast %63 : vector<2x8x32xf32> to vector<16x32xf32>
    %c0_19 = arith.constant 0 : index
    %c0_20 = arith.constant 0 : index
    %65 = vector.load %arg5[%c0_19, %c0_20] : memref<32x32xf32, #tpu.memory_space<vmem>>, vector<32x32xf32>
    %cst_21 = arith.constant dense<0.000000e+00> : vector<16x32xf32>
    %66 = tpu.matmul %64, %65, %cst_21 {dimension_numbers = #tpu.dot_dimension_numbers<[1], [0], [0], [1], [0, 0, 1, 1], [], []>} : vector<16x32xf32>, vector<32x32xf32>, vector<16x32xf32> -> vector<16x32xf32>
    %67 = arith.addf %8, %66 : vector<16x32xf32>
    %c0_22 = arith.constant 0 : index
    %c0_23 = arith.constant 0 : index
    %68 = vector.load %arg6[%c0_22, %c0_23] : memref<1x32xf32, #tpu.memory_space<vmem>>, vector<1x32xf32>
    %69 = vector.broadcast %68 : vector<1x32xf32> to vector<16x32xf32>
    %70 = arith.addf %67, %69 : vector<16x32xf32>
    %71 = arith.addf %70, %3 : vector<16x32xf32>
    %cst_24 = arith.constant dense<0.000000e+00> : vector<16xf32>
    %72 = vector.multi_reduction <add>, %71, %cst_24 [1] : vector<16x32xf32> to vector<16xf32>
    %73 = vector.shape_cast %72 : vector<16xf32> to vector<16x1xf32>
    %cst_25 = arith.constant 3.200000e+01 : f32
    %74 = vector.broadcast %cst_25 : f32 to vector<16x1xf32>
    %75 = arith.divf %73, %74 : vector<16x1xf32>
    %76 = vector.broadcast %75 : vector<16x1xf32> to vector<16x32xf32>
    %77 = arith.subf %71, %76 : vector<16x32xf32>
    %78 = arith.mulf %77, %77 : vector<16x32xf32>
    %cst_26 = arith.constant dense<0.000000e+00> : vector<16xf32>
    %79 = vector.multi_reduction <add>, %78, %cst_26 [1] : vector<16x32xf32> to vector<16xf32>
    %80 = vector.shape_cast %79 : vector<16xf32> to vector<16x1xf32>
    %cst_27 = arith.constant 3.200000e+01 : f32
    %81 = vector.broadcast %cst_27 : f32 to vector<16x1xf32>
    %82 = arith.divf %80, %81 : vector<16x1xf32>
    %83 = vector.broadcast %75 : vector<16x1xf32> to vector<16x32xf32>
    %84 = arith.subf %71, %83 : vector<16x32xf32>
    %cst_28 = arith.constant 9.99999974E-6 : f32
    %85 = vector.broadcast %cst_28 : f32 to vector<16x1xf32>
    %86 = arith.addf %82, %85 : vector<16x1xf32>
    %87 = math.rsqrt %86 : vector<16x1xf32>
    %88 = vector.broadcast %87 : vector<16x1xf32> to vector<16x32xf32>
    %89 = arith.mulf %84, %88 : vector<16x32xf32>
    %c0_29 = arith.constant 0 : index
    %c0_30 = arith.constant 0 : index
    %90 = vector.load %arg7[%c0_29, %c0_30] : memref<1x32xf32, #tpu.memory_space<vmem>>, vector<1x32xf32>
    %91 = vector.broadcast %90 : vector<1x32xf32> to vector<16x32xf32>
    %92 = arith.mulf %89, %91 : vector<16x32xf32>
    %c0_31 = arith.constant 0 : index
    %c0_32 = arith.constant 0 : index
    %93 = vector.load %arg8[%c0_31, %c0_32] : memref<1x32xf32, #tpu.memory_space<vmem>>, vector<1x32xf32>
    %94 = vector.broadcast %93 : vector<1x32xf32> to vector<16x32xf32>
    %95 = arith.addf %92, %94 : vector<16x32xf32>
    %96 = vector.shape_cast %95 : vector<16x32xf32> to vector<2x8x32xf32>
    %c0_33 = arith.constant 0 : index
    %c0_34 = arith.constant 0 : index
    %c0_35 = arith.constant 0 : index
    %97 = vector.load %arg9[%c0_33, %c0_34, %c0_35] : memref<2x8x32xf32, #tpu.memory_space<vmem>>, vector<2x8x32xf32>
    tpu.vector_store %arg9[%c0_33, %c0_34, %c0_35], %96 {strides = array<i32>} : memref<2x8x32xf32, #tpu.memory_space<vmem>>, vector<2x8x32xf32>,
    return
  }
  func.func @transform_0(%arg0: i32) -> (i32, i32, i32) {
    %c0_i32 = arith.constant 0 : i32
    %c0_i32_0 = arith.constant 0 : i32
    %c0_i32_1 = arith.constant 0 : i32
    return %arg0, %c0_i32, %c0_i32_0 : i32, i32, i32
  }
  func.func @transform_1(%arg0: i32) -> (i32, i32, i32) {
    %c0_i32 = arith.constant 0 : i32
    %c0_i32_0 = arith.constant 0 : i32
    %c0_i32_1 = arith.constant 0 : i32
    return %arg0, %c0_i32, %c0_i32_0 : i32, i32, i32
  }
  func.func @transform_2(%arg0: i32) -> (i32, i32) {
    %c0_i32 = arith.constant 0 : i32
    %c0_i32_0 = arith.constant 0 : i32
    %c0_i32_1 = arith.constant 0 : i32
    return %c0_i32, %c0_i32_0 : i32, i32
  }
  func.func @transform_3(%arg0: i32) -> (i32, i32) {
    %c0_i32 = arith.constant 0 : i32
    %c0_i32_0 = arith.constant 0 : i32
    %c0_i32_1 = arith.constant 0 : i32
    return %c0_i32, %c0_i32_0 : i32, i32
  }
  func.func @transform_4(%arg0: i32) -> (i32, i32) {
    %c0_i32 = arith.constant 0 : i32
    %c0_i32_0 = arith.constant 0 : i32
    %c0_i32_1 = arith.constant 0 : i32
    return %c0_i32, %c0_i32_0 : i32, i32
  }
  func.func @transform_5(%arg0: i32) -> (i32, i32) {
    %c0_i32 = arith.constant 0 : i32
    %c0_i32_0 = arith.constant 0 : i32
    %c0_i32_1 = arith.constant 0 : i32
    return %c0_i32, %c0_i32_0 : i32, i32
  }
  func.func @transform_6(%arg0: i32) -> (i32, i32) {
    %c0_i32 = arith.constant 0 : i32
    %c0_i32_0 = arith.constant 0 : i32
    %c0_i32_1 = arith.constant 0 : i32
    return %c0_i32, %c0_i32_0 : i32, i32
  }
  func.func @transform_7(%arg0: i32) -> (i32, i32) {
    %c0_i32 = arith.constant 0 : i32
    %c0_i32_0 = arith.constant 0 : i32
    %c0_i32_1 = arith.constant 0 : i32
    return %c0_i32, %c0_i32_0 : i32, i32
  }
  func.func @transform_8(%arg0: i32) -> (i32, i32, i32) {
    %c0_i32 = arith.constant 0 : i32
    %c0_i32_0 = arith.constant 0 : i32
    %c0_i32_1 = arith.constant 0 : i32
    return %arg0, %c0_i32, %c0_i32_0 : i32, i32, i32
  }
  func.func @transform_9(%arg0: i32) -> (i32, i32, i32, i32) {
    %c0_i32 = arith.constant 0 : i32
    %c0_i32_0 = arith.constant 0 : i32
    %c0_i32_1 = arith.constant 0 : i32
    %c0_i32_2 = arith.constant 0 : i32
    return %arg0, %c0_i32, %c0_i32_0, %c0_i32_1 : i32, i32, i32, i32
  }
}

</mosaic_0001>

<llo_original>
// kernel: attention_forward.1
$region0: #{attention_forward.1}
  #allocation0 [shape = 'u32[]', space=smem, size = 0x4, offset = 0x4, fixed_abs, tag = 'smem constant byte address 0x4 - core index']
  #allocation1 [shape = 'u32[72,128]{1,0:T(1,128)}', space=vmem, size = 0x9000, scoped, tag = 'internal scratch']
  %s0 = inlined_call_operand.vmem [shape: f32[2,8,32], index: 0, kind: input, shape index: {}]
  %s1 = inlined_call_operand.vmem [shape: f32[2,8,32], index: 1, kind: input, shape index: {}]
  %s2 = inlined_call_operand.vmem [shape: f32[32,64], index: 2, kind: input, shape index: {}]
  %s3 = inlined_call_operand.vmem [shape: f32[32,64], index: 3, kind: input, shape index: {}]
  %s4 = inlined_call_operand.vmem [shape: f32[32,32], index: 4, kind: input, shape index: {}]
  %s5 = inlined_call_operand.vmem [shape: f32[1,32], index: 5, kind: input, shape index: {}]
  %s6 = inlined_call_operand.vmem [shape: f32[1,32], index: 6, kind: input, shape index: {}]
  %s7 = inlined_call_operand.vmem [shape: f32[1,32], index: 7, kind: input, shape index: {}]
  %s8 = inlined_call_operand.hbm [shape: f32[2,8,32], index: 8, kind: output, shape index: {0}]
  %s9 = inlined_call_operand.vmem [shape: f32[2,4,8,8], index: 9, kind: output, shape index: {1}]
  %10 = xla_tuple %s8, %s9
  %s11 = sld [smem:[#allocation0]]
  $region50: #{attention_forward.1} parent=0
    _
  %s13 = ssub.s32 1, %s11
  %s14 = scalar_select 0, %s13, %s11
  $region1: #{attention_forward.1} parent=0
    #allocation2 [shape = 'u8[8192]{0}', space=vmem, size = 0x2000, scoped, tag = 'output window, operand 0, single buffered']
    #allocation3 [shape = 's32[1]{0}', space=sflag, size = 0x4, scoped, tag = 'scoped memory for attention_forward.1']
    %15 = vsyncpa [#allocation3], 0
    // Predicated region
    $region2: #{attention_forward.1} parent=1 // pred_check
      _
    $region3: #{attention_forward.1} parent=1 // pred_check_branch
      %17 = sbr.rel (0) target = $region5
    $region4: #{attention_forward.1} parent=1 // pred_region
      _
    $region5: #{attention_forward.1} parent=1 // pred_fallthru
      _
    // Predicated region
    $region6: #{attention_forward.1} parent=1 // pred_check
      _
    $region7: #{attention_forward.1} parent=1 // pred_check_branch
      %19 = sbr.rel (0) target = $region9
    $region8: #{attention_forward.1} parent=1 // pred_region
      _
    $region9: #{attention_forward.1} parent=1 // pred_fallthru
      _
    // Predicated region
    $region10: #{attention_forward.1} parent=1 // pred_check
      _
    $region11: #{attention_forward.1} parent=1 // pred_check_branch
      %21 = sbr.rel (0) target = $region13
    $region12: #{attention_forward.1} parent=1 // pred_region
      _
    $region13: #{attention_forward.1} parent=1 // pred_fallthru
      _
    // Predicated region
    $region14: #{attention_forward.1} parent=1 // pred_check
      _
    $region15: #{attention_forward.1} parent=1 // pred_check_branch
      %23 = sbr.rel (0) target = $region17
    $region16: #{attention_forward.1} parent=1 // pred_region
      _
    $region17: #{attention_forward.1} parent=1 // pred_fallthru
      _
    // Predicated region
    $region18: #{attention_forward.1} parent=1 // pred_check
      _
    $region19: #{attention_forward.1} parent=1 // pred_check_branch
      %25 = sbr.rel (0) target = $region21
    $region20: #{attention_forward.1} parent=1 // pred_region
      _
    $region21: #{attention_forward.1} parent=1 // pred_fallthru
      _
    // Predicated region
    $region22: #{attention_forward.1} parent=1 // pred_check
      _
    $region23: #{attention_forward.1} parent=1 // pred_check_branch
      %27 = sbr.rel (0) target = $region25
    $region24: #{attention_forward.1} parent=1 // pred_region
      _
    $region25: #{attention_forward.1} parent=1 // pred_fallthru
      _
    // Predicated region
    $region26: #{attention_forward.1} parent=1 // pred_check
      _
    $region27: #{attention_forward.1} parent=1 // pred_check_branch
      %29 = sbr.rel (0) target = $region29
    $region28: #{attention_forward.1} parent=1 // pred_region
      _
    $region29: #{attention_forward.1} parent=1 // pred_fallthru
      _
    // Predicated region
    $region30: #{attention_forward.1} parent=1 // pred_check
      _
    $region31: #{attention_forward.1} parent=1 // pred_check_branch
      %31 = sbr.rel (0) target = $region33
    $region32: #{attention_forward.1} parent=1 // pred_region
      _
    $region33: #{attention_forward.1} parent=1 // pred_fallthru
      _
    %v32 = vld [vmem:[%s0] sm:$0xff]
    %v33 = vld [vmem:[%s0 + $0x8] sm:$0xff]
    %v34 = vld [vmem:[%s1] sm:$0xff]
    %v35 = vld [vmem:[%s1 + $0x8] sm:$0xff]
    %v36 = vld [vmem:[%s2] sm:$0xff]
    %v37 = vld [vmem:[%s2 + $0x8] sm:$0xff]
    %v38 = vld [vmem:[%s2 + $0x10] sm:$0xff]
    %v39 = vld [vmem:[%s2 + $0x18] sm:$0xff]
    %vm40 = vcmask 261120
    %v42 = vsel %vm40, %v32, 0
    %v45 = vsel %vm40, %v33, 0
    %47 = vmatpush.msra.mxu0 0.0
    %48 = vmatpush.msra.mxu0 0.0
    %49 = vmatpush.msra.mxu0 0.0
    %50 = vmatpush.msra.mxu0 0.0
    %51 = vmatpush.msra.mxu0 0.0
    %52 = vmatpush.msra.mxu0 0.0
    %53 = vmatpush.msra.mxu0 0.0
    %54 = vmatpush.msra.mxu0 0.0
    %55 = vmatpush.msra.mxu0 0.0
    %56 = vmatpush.msra.mxu0 0.0
    %57 = vmatpush.msra.mxu0 0.0
    %58 = vmatpush.msra.mxu0 0.0
    %59 = vmatpush.msra.mxu0 %v39
    %60 = vmatpush.msra.mxu0 %v38
    %61 = vmatpush.msra.mxu0 %v37
    %62 = vmatpush.msra.mxu0 %v36
    %63 = vmatmul.f32.gmra.mxu0 %v42
    %v64 = vpop.f32.mrf.mxu0
    %v65 = vadd.f32 0.0, %v64
    %66 = vmatmul.f32.gmra.mxu0 %v45
    %v67 = vpop.f32.mrf.mxu0
    %v68 = vadd.f32 0.0, %v67
    %69 = vdwg.mxu0
    %v70 = vld [vmem:[%s3] sm:$0xff]
    %v71 = vld [vmem:[%s3 + $0x8] sm:$0xff]
    %v72 = vld [vmem:[%s3 + $0x10] sm:$0xff]
    %v73 = vld [vmem:[%s3 + $0x18] sm:$0xff]
    %v75 = vsel %vm40, %v34, 0
    %v78 = vsel %vm40, %v35, 0
    %80 = vmatpush.msra.mxu0 0.0
    %81 = vmatpush.msra.mxu0 0.0
    %82 = vmatpush.msra.mxu0 0.0
    %83 = vmatpush.msra.mxu0 0.0
    %84 = vmatpush.msra.mxu0 0.0
    %85 = vmatpush.msra.mxu0 0.0
    %86 = vmatpush.msra.mxu0 0.0
    %87 = vmatpush.msra.mxu0 0.0
    %88 = vmatpush.msra.mxu0 0.0
    %89 = vmatpush.msra.mxu0 0.0
    %90 = vmatpush.msra.mxu0 0.0
    %91 = vmatpush.msra.mxu0 0.0
    %92 = vmatpush.msra.mxu0 %v73
    %93 = vmatpush.msra.mxu0 %v72
    %94 = vmatpush.msra.mxu0 %v71
    %95 = vmatpush.msra.mxu0 %v70
    %96 = vmatmul.f32.gmra.mxu0 %v75
    %v97 = vpop.f32.mrf.mxu0
    %v98 = vadd.f32 0.0, %v97
    %99 = vmatmul.f32.gmra.mxu0 %v78
    %v100 = vpop.f32.mrf.mxu0
    %v101 = vadd.f32 0.0, %v100
    %102 = vdwg.mxu0
    %105 = vrot.lane.b32.xlu0 %v98, 120
    %v106 = vpop.permute.xlu0 %105
    %107 = vrot.lane.b32.xlu0 %v101, 120
    %v108 = vpop.permute.xlu0 %107
    %109 = vrot.lane.b32.xlu0 %v98, 112
    %v110 = vpop.permute.xlu0 %109
    %111 = vrot.lane.b32.xlu0 %v101, 112
    %v112 = vpop.permute.xlu0 %111
    %113 = vrot.lane.b32.xlu0 %v98, 104
    %v114 = vpop.permute.xlu0 %113
    %115 = vrot.lane.b32.xlu0 %v101, 104
    %v116 = vpop.permute.xlu0 %115
    %119 = vrot.lane.b32.xlu0 %v65, 120
    %v120 = vpop.permute.xlu0 %119
    %121 = vrot.lane.b32.xlu0 %v68, 120
    %v122 = vpop.permute.xlu0 %121
    %123 = vrot.lane.b32.xlu0 %v65, 112
    %v124 = vpop.permute.xlu0 %123
    %125 = vrot.lane.b32.xlu0 %v68, 112
    %v126 = vpop.permute.xlu0 %125
    %127 = vrot.lane.b32.xlu0 %v65, 104
    %v128 = vpop.permute.xlu0 %127
    %129 = vrot.lane.b32.xlu0 %v68, 104
    %v130 = vpop.permute.xlu0 %129
    %vm131 = vcmask 64512
    %v132 = vsel %vm131, %v98, 0
    %v134 = vsel %vm131, %v65, 0
    %136 = vmatpush.xpose.msra.mxu0 0.0
    %137 = vmatpush.xpose.msra.mxu0 0.0
    %138 = vmatpush.xpose.msra.mxu0 0.0
    %139 = vmatpush.xpose.msra.mxu0 0.0
    %140 = vmatpush.xpose.msra.mxu0 0.0
    %141 = vmatpush.xpose.msra.mxu0 0.0
    %142 = vmatpush.xpose.msra.mxu0 0.0
    %143 = vmatpush.xpose.msra.mxu0 0.0
    %144 = vmatpush.xpose.msra.mxu0 0.0
    %145 = vmatpush.xpose.msra.mxu0 0.0
    %146 = vmatpush.xpose.msra.mxu0 0.0
    %147 = vmatpush.xpose.msra.mxu0 0.0
    %148 = vmatpush.xpose.msra.mxu0 0.0
    %149 = vmatpush.xpose.msra.mxu0 0.0
    %150 = vmatpush.xpose.msra.mxu0 0.0
    %151 = vmatpush.xpose.msra.mxu0 %v134
    %152 = vmatmul.f32.gmra.mxu0 %v132
    %v153 = vpop.f32.mrf.mxu0
    %v154 = vadd.f32 0.0, %v153
    %155 = vdwg.mxu0
    %v156 = vsel %vm131, %v106, 0
    %v158 = vsel %vm131, %v120, 0
    %160 = vmatpush.xpose.msra.mxu0 0.0
    %161 = vmatpush.xpose.msra.mxu0 0.0
    %162 = vmatpush.xpose.msra.mxu0 0.0
    %163 = vmatpush.xpose.msra.mxu0 0.0
    %164 = vmatpush.xpose.msra.mxu0 0.0
    %165 = vmatpush.xpose.msra.mxu0 0.0
    %166 = vmatpush.xpose.msra.mxu0 0.0
    %167 = vmatpush.xpose.msra.mxu0 0.0
    %168 = vmatpush.xpose.msra.mxu0 0.0
    %169 = vmatpush.xpose.msra.mxu0 0.0
    %170 = vmatpush.xpose.msra.mxu0 0.0
    %171 = vmatpush.xpose.msra.mxu0 0.0
    %172 = vmatpush.xpose.msra.mxu0 0.0
    %173 = vmatpush.xpose.msra.mxu0 0.0
    %174 = vmatpush.xpose.msra.mxu0 0.0
    %175 = vmatpush.xpose.msra.mxu0 %v158
    %176 = vmatmul.f32.gmra.mxu0 %v156
    %v177 = vpop.f32.mrf.mxu0
    %v178 = vadd.f32 0.0, %v177
    %179 = vdwg.mxu0
    %v180 = vsel %vm131, %v110, 0
    %v182 = vsel %vm131, %v124, 0
    %184 = vmatpush.xpose.msra.mxu0 0.0
    %185 = vmatpush.xpose.msra.mxu0 0.0
    %186 = vmatpush.xpose.msra.mxu0 0.0
    %187 = vmatpush.xpose.msra.mxu0 0.0
    %188 = vmatpush.xpose.msra.mxu0 0.0
    %189 = vmatpush.xpose.msra.mxu0 0.0
    %190 = vmatpush.xpose.msra.mxu0 0.0
    %191 = vmatpush.xpose.msra.mxu0 0.0
    %192 = vmatpush.xpose.msra.mxu0 0.0
    %193 = vmatpush.xpose.msra.mxu0 0.0
    %194 = vmatpush.xpose.msra.mxu0 0.0
    %195 = vmatpush.xpose.msra.mxu0 0.0
    %196 = vmatpush.xpose.msra.mxu0 0.0
    %197 = vmatpush.xpose.msra.mxu0 0.0
    %198 = vmatpush.xpose.msra.mxu0 0.0
    %199 = vmatpush.xpose.msra.mxu0 %v182
    %200 = vmatmul.f32.gmra.mxu0 %v180
    %v201 = vpop.f32.mrf.mxu0
    %v202 = vadd.f32 0.0, %v201
    %203 = vdwg.mxu0
    %v204 = vsel %vm131, %v114, 0
    %v206 = vsel %vm131, %v128, 0
    %208 = vmatpush.xpose.msra.mxu0 0.0
    %209 = vmatpush.xpose.msra.mxu0 0.0
    %210 = vmatpush.xpose.msra.mxu0 0.0
    %211 = vmatpush.xpose.msra.mxu0 0.0
    %212 = vmatpush.xpose.msra.mxu0 0.0
    %213 = vmatpush.xpose.msra.mxu0 0.0
    %214 = vmatpush.xpose.msra.mxu0 0.0
    %215 = vmatpush.xpose.msra.mxu0 0.0
    %216 = vmatpush.xpose.msra.mxu0 0.0
    %217 = vmatpush.xpose.msra.mxu0 0.0
    %218 = vmatpush.xpose.msra.mxu0 0.0
    %219 = vmatpush.xpose.msra.mxu0 0.0
    %220 = vmatpush.xpose.msra.mxu0 0.0
    %221 = vmatpush.xpose.msra.mxu0 0.0
    %222 = vmatpush.xpose.msra.mxu0 0.0
    %223 = vmatpush.xpose.msra.mxu0 %v206
    %224 = vmatmul.f32.gmra.mxu0 %v204
    %v225 = vpop.f32.mrf.mxu0
    %v226 = vadd.f32 0.0, %v225
    %227 = vdwg.mxu0
    %v228 = vsel %vm131, %v101, 0
    %v230 = vsel %vm131, %v68, 0
    %232 = vmatpush.xpose.msra.mxu0 0.0
    %233 = vmatpush.xpose.msra.mxu0 0.0
    %234 = vmatpush.xpose.msra.mxu0 0.0
    %235 = vmatpush.xpose.msra.mxu0 0.0
    %236 = vmatpush.xpose.msra.mxu0 0.0
    %237 = vmatpush.xpose.msra.mxu0 0.0
    %238 = vmatpush.xpose.msra.mxu0 0.0
    %239 = vmatpush.xpose.msra.mxu0 0.0
    %240 = vmatpush.xpose.msra.mxu0 0.0
    %241 = vmatpush.xpose.msra.mxu0 0.0
    %242 = vmatpush.xpose.msra.mxu0 0.0
    %243 = vmatpush.xpose.msra.mxu0 0.0
    %244 = vmatpush.xpose.msra.mxu0 0.0
    %245 = vmatpush.xpose.msra.mxu0 0.0
    %246 = vmatpush.xpose.msra.mxu0 0.0
    %247 = vmatpush.xpose.msra.mxu0 %v230
    %248 = vmatmul.f32.gmra.mxu0 %v228
    %v249 = vpop.f32.mrf.mxu0
    %v250 = vadd.f32 0.0, %v249
    %251 = vdwg.mxu0
    %v252 = vsel %vm131, %v108, 0
    %v254 = vsel %vm131, %v122, 0
    %256 = vmatpush.xpose.msra.mxu0 0.0
    %257 = vmatpush.xpose.msra.mxu0 0.0
    %258 = vmatpush.xpose.msra.mxu0 0.0
    %259 = vmatpush.xpose.msra.mxu0 0.0
    %260 = vmatpush.xpose.msra.mxu0 0.0
    %261 = vmatpush.xpose.msra.mxu0 0.0
    %262 = vmatpush.xpose.msra.mxu0 0.0
    %263 = vmatpush.xpose.msra.mxu0 0.0
    %264 = vmatpush.xpose.msra.mxu0 0.0
    %265 = vmatpush.xpose.msra.mxu0 0.0
    %266 = vmatpush.xpose.msra.mxu0 0.0
    %267 = vmatpush.xpose.msra.mxu0 0.0
    %268 = vmatpush.xpose.msra.mxu0 0.0
    %269 = vmatpush.xpose.msra.mxu0 0.0
    %270 = vmatpush.xpose.msra.mxu0 0.0
    %271 = vmatpush.xpose.msra.mxu0 %v254
    %272 = vmatmul.f32.gmra.mxu0 %v252
    %v273 = vpop.f32.mrf.mxu0
    %v274 = vadd.f32 0.0, %v273
    %275 = vdwg.mxu0
    %v276 = vsel %vm131, %v112, 0
    %v278 = vsel %vm131, %v126, 0
    %280 = vmatpush.xpose.msra.mxu0 0.0
    %281 = vmatpush.xpose.msra.mxu0 0.0
    %282 = vmatpush.xpose.msra.mxu0 0.0
    %283 = vmatpush.xpose.msra.mxu0 0.0
    %284 = vmatpush.xpose.msra.mxu0 0.0
    %285 = vmatpush.xpose.msra.mxu0 0.0
    %286 = vmatpush.xpose.msra.mxu0 0.0
    %287 = vmatpush.xpose.msra.mxu0 0.0
    %288 = vmatpush.xpose.msra.mxu0 0.0
    %289 = vmatpush.xpose.msra.mxu0 0.0
    %290 = vmatpush.xpose.msra.mxu0 0.0
    %291 = vmatpush.xpose.msra.mxu0 0.0
    %292 = vmatpush.xpose.msra.mxu0 0.0
    %293 = vmatpush.xpose.msra.mxu0 0.0
    %294 = vmatpush.xpose.msra.mxu0 0.0
    %295 = vmatpush.xpose.msra.mxu0 %v278
    %296 = vmatmul.f32.gmra.mxu0 %v276
    %v297 = vpop.f32.mrf.mxu0
    %v298 = vadd.f32 0.0, %v297
    %299 = vdwg.mxu0
    %v300 = vsel %vm131, %v116, 0
    %v302 = vsel %vm131, %v130, 0
    %304 = vmatpush.xpose.msra.mxu0 0.0
    %305 = vmatpush.xpose.msra.mxu0 0.0
    %306 = vmatpush.xpose.msra.mxu0 0.0
    %307 = vmatpush.xpose.msra.mxu0 0.0
    %308 = vmatpush.xpose.msra.mxu0 0.0
    %309 = vmatpush.xpose.msra.mxu0 0.0
    %310 = vmatpush.xpose.msra.mxu0 0.0
    %311 = vmatpush.xpose.msra.mxu0 0.0
    %312 = vmatpush.xpose.msra.mxu0 0.0
    %313 = vmatpush.xpose.msra.mxu0 0.0
    %314 = vmatpush.xpose.msra.mxu0 0.0
    %315 = vmatpush.xpose.msra.mxu0 0.0
    %316 = vmatpush.xpose.msra.mxu0 0.0
    %317 = vmatpush.xpose.msra.mxu0 0.0
    %318 = vmatpush.xpose.msra.mxu0 0.0
    %319 = vmatpush.xpose.msra.mxu0 %v302
    %320 = vmatmul.f32.gmra.mxu0 %v300
    %v321 = vpop.f32.mrf.mxu0
    %v322 = vadd.f32 0.0, %v321
    %323 = vdwg.mxu0
    %v324 = vmul.f32 %v154, 0.35355338
    %v325 = vmul.f32 %v178, 0.35355338
    %v326 = vmul.f32 %v202, 0.35355338
    %v327 = vmul.f32 %v226, 0.35355338
    %v328 = vmul.f32 %v250, 0.35355338
    %v329 = vmul.f32 %v274, 0.35355338
    %v330 = vmul.f32 %v298, 0.35355338
    %v331 = vmul.f32 %v322, 0.35355338
    %v332 = vsel %vm131, %v324, -inf
    %333 = vmax.xlane.f32.xlu0 %v332
    %v334 = vpop.xlane.xlu0 %333
    %v335 = vsel %vm131, %v325, -inf
    %336 = vmax.xlane.f32.xlu0 %v335
    %v337 = vpop.xlane.xlu0 %336
    %v338 = vsel %vm131, %v326, -inf
    %339 = vmax.xlane.f32.xlu0 %v338
    %v340 = vpop.xlane.xlu0 %339
    %v341 = vsel %vm131, %v327, -inf
    %342 = vmax.xlane.f32.xlu0 %v341
    %v343 = vpop.xlane.xlu0 %342
    %v344 = vsel %vm131, %v328, -inf
    %345 = vmax.xlane.f32.xlu0 %v344
    %v346 = vpop.xlane.xlu0 %345
    %v347 = vsel %vm131, %v329, -inf
    %348 = vmax.xlane.f32.xlu0 %v347
    %v349 = vpop.xlane.xlu0 %348
    %v350 = vsel %vm131, %v330, -inf
    %351 = vmax.xlane.f32.xlu0 %v350
    %v352 = vpop.xlane.xlu0 %351
    %v353 = vsel %vm131, %v331, -inf
    %354 = vmax.xlane.f32.xlu0 %v353
    %v355 = vpop.xlane.xlu0 %354
    %v356 = vsub.f32 %v324, %v334
    %v357 = vsub.f32 %v325, %v337
    %v358 = vsub.f32 %v326, %v340
    %v359 = vsub.f32 %v327, %v343
    %v360 = vsub.f32 %v328, %v346
    %v361 = vsub.f32 %v329, %v349
    %v362 = vsub.f32 %v330, %v352
    %v363 = vsub.f32 %v331, %v355
    %v364 = vmul.f32 %v356, 1.442695
    %v365 = vpow.pop %v364
    %v366 = vmul.f32 %v357, 1.442695
    %v367 = vpow.pop %v366
    %v368 = vmul.f32 %v358, 1.442695
    %v369 = vpow.pop %v368
    %v370 = vmul.f32 %v359, 1.442695
    %v371 = vpow.pop %v370
    %v372 = vmul.f32 %v360, 1.442695
    %v373 = vpow.pop %v372
    %v374 = vmul.f32 %v361, 1.442695
    %v375 = vpow.pop %v374
    %v376 = vmul.f32 %v362, 1.442695
    %v377 = vpow.pop %v376
    %v378 = vmul.f32 %v363, 1.442695
    %v379 = vpow.pop %v378
    %v380 = vsel %vm131, %v365, 0.0
    %381 = vadd.xlane.f32.xlu0 %v380
    %v382 = vpop.xlane.xlu0 %381
    %v383 = vsel %vm131, %v367, 0.0
    %384 = vadd.xlane.f32.xlu0 %v383
    %v385 = vpop.xlane.xlu0 %384
    %v386 = vsel %vm131, %v369, 0.0
    %387 = vadd.xlane.f32.xlu0 %v386
    %v388 = vpop.xlane.xlu0 %387
    %v389 = vsel %vm131, %v371, 0.0
    %390 = vadd.xlane.f32.xlu0 %v389
    %v391 = vpop.xlane.xlu0 %390
    %v392 = vsel %vm131, %v373, 0.0
    %393 = vadd.xlane.f32.xlu0 %v392
    %v394 = vpop.xlane.xlu0 %393
    %v395 = vsel %vm131, %v375, 0.0
    %396 = vadd.xlane.f32.xlu0 %v395
    %v397 = vpop.xlane.xlu0 %396
    %v398 = vsel %vm131, %v377, 0.0
    %399 = vadd.xlane.f32.xlu0 %v398
    %v400 = vpop.xlane.xlu0 %399
    %v401 = vsel %vm131, %v379, 0.0
    %402 = vadd.xlane.f32.xlu0 %v401
    %v403 = vpop.xlane.xlu0 %402
    %v404 = vrcp.pop %v382
    %v405 = vmul.f32 %v382, %v404
    %v406 = vsub.f32 1.0, %v405
    %v407 = vmul.f32 %v404, %v406
    %v408 = vadd.f32 %v404, %v407
    %vm409 = vweird.f32 %v382
    %vm410 = vweird.f32 %v404
    %vm411 = vmor %vm409, %vm410
    %v412 = vsel %vm411, %v404, %v408
    %v413 = vand.u32 2147483647, %v382
    %vm414 = vcmp.eq.f32.partialorder %v413, 8.507059e+37
    %v415 = vand.u32 %v382, 2147483648
    %v416 = vor.u32 1.1754944e-38, %v415
    %v417 = vsel %vm414, %v416, %v412
    %v418 = vmul.f32 %v365, %v417
    %v419 = vrcp.pop %v385
    %v420 = vmul.f32 %v385, %v419
    %v421 = vsub.f32 1.0, %v420
    %v422 = vmul.f32 %v419, %v421
    %v423 = vadd.f32 %v419, %v422
    %vm424 = vweird.f32 %v385
    %vm425 = vweird.f32 %v419
    %vm426 = vmor %vm424, %vm425
    %v427 = vsel %vm426, %v419, %v423
    %v428 = vand.u32 2147483647, %v385
    %vm429 = vcmp.eq.f32.partialorder %v428, 8.507059e+37
    %v430 = vand.u32 %v385, 2147483648
    %v431 = vor.u32 1.1754944e-38, %v430
    %v432 = vsel %vm429, %v431, %v427
    %v433 = vmul.f32 %v367, %v432
    %v434 = vrcp.pop %v388
    %v435 = vmul.f32 %v388, %v434
    %v436 = vsub.f32 1.0, %v435
    %v437 = vmul.f32 %v434, %v436
    %v438 = vadd.f32 %v434, %v437
    %vm439 = vweird.f32 %v388
    %vm440 = vweird.f32 %v434
    %vm441 = vmor %vm439, %vm440
    %v442 = vsel %vm441, %v434, %v438
    %v443 = vand.u32 2147483647, %v388
    %vm444 = vcmp.eq.f32.partialorder %v443, 8.507059e+37
    %v445 = vand.u32 %v388, 2147483648
    %v446 = vor.u32 1.1754944e-38, %v445
    %v447 = vsel %vm444, %v446, %v442
    %v448 = vmul.f32 %v369, %v447
    %v449 = vrcp.pop %v391
    %v450 = vmul.f32 %v391, %v449
    %v451 = vsub.f32 1.0, %v450
    %v452 = vmul.f32 %v449, %v451
    %v453 = vadd.f32 %v449, %v452
    %vm454 = vweird.f32 %v391
    %vm455 = vweird.f32 %v449
    %vm456 = vmor %vm454, %vm455
    %v457 = vsel %vm456, %v449, %v453
    %v458 = vand.u32 2147483647, %v391
    %vm459 = vcmp.eq.f32.partialorder %v458, 8.507059e+37
    %v460 = vand.u32 %v391, 2147483648
    %v461 = vor.u32 1.1754944e-38, %v460
    %v462 = vsel %vm459, %v461, %v457
    %v463 = vmul.f32 %v371, %v462
    %v464 = vrcp.pop %v394
    %v465 = vmul.f32 %v394, %v464
    %v466 = vsub.f32 1.0, %v465
    %v467 = vmul.f32 %v464, %v466
    %v468 = vadd.f32 %v464, %v467
    %vm469 = vweird.f32 %v394
    %vm470 = vweird.f32 %v464
    %vm471 = vmor %vm469, %vm470
    %v472 = vsel %vm471, %v464, %v468
    %v473 = vand.u32 2147483647, %v394
    %vm474 = vcmp.eq.f32.partialorder %v473, 8.507059e+37
    %v475 = vand.u32 %v394, 2147483648
    %v476 = vor.u32 1.1754944e-38, %v475
    %v477 = vsel %vm474, %v476, %v472
    %v478 = vmul.f32 %v373, %v477
    %v479 = vrcp.pop %v397
    %v480 = vmul.f32 %v397, %v479
    %v481 = vsub.f32 1.0, %v480
    %v482 = vmul.f32 %v479, %v481
    %v483 = vadd.f32 %v479, %v482
    %vm484 = vweird.f32 %v397
    %vm485 = vweird.f32 %v479
    %vm486 = vmor %vm484, %vm485
    %v487 = vsel %vm486, %v479, %v483
    %v488 = vand.u32 2147483647, %v397
    %vm489 = vcmp.eq.f32.partialorder %v488, 8.507059e+37
    %v490 = vand.u32 %v397, 2147483648
    %v491 = vor.u32 1.1754944e-38, %v490
    %v492 = vsel %vm489, %v491, %v487
    %v493 = vmul.f32 %v375, %v492
    %v494 = vrcp.pop %v400
    %v495 = vmul.f32 %v400, %v494
    %v496 = vsub.f32 1.0, %v495
    %v497 = vmul.f32 %v494, %v496
    %v498 = vadd.f32 %v494, %v497
    %vm499 = vweird.f32 %v400
    %vm500 = vweird.f32 %v494
    %vm501 = vmor %vm499, %vm500
    %v502 = vsel %vm501, %v494, %v498
    %v503 = vand.u32 2147483647, %v400
    %vm504 = vcmp.eq.f32.partialorder %v503, 8.507059e+37
    %v505 = vand.u32 %v400, 2147483648
    %v506 = vor.u32 1.1754944e-38, %v505
    %v507 = vsel %vm504, %v506, %v502
    %v508 = vmul.f32 %v377, %v507
    %v509 = vrcp.pop %v403
    %v510 = vmul.f32 %v403, %v509
    %v511 = vsub.f32 1.0, %v510
    %v512 = vmul.f32 %v509, %v511
    %v513 = vadd.f32 %v509, %v512
    %vm514 = vweird.f32 %v403
    %vm515 = vweird.f32 %v509
    %vm516 = vmor %vm514, %vm515
    %v517 = vsel %vm516, %v509, %v513
    %v518 = vand.u32 2147483647, %v403
    %vm519 = vcmp.eq.f32.partialorder %v518, 8.507059e+37
    %v520 = vand.u32 %v403, 2147483648
    %v521 = vor.u32 1.1754944e-38, %v520
    %v522 = vsel %vm519, %v521, %v517
    %v523 = vmul.f32 %v379, %v522
    %524 = vst.msk [vmem:[%s9] sm:$0xff] %vm131, %v418
    %525 = vst.msk [vmem:[%s9 + $0x8] sm:$0xff] %vm131, %v433
    %526 = vst.msk [vmem:[%s9 + $0x10] sm:$0xff] %vm131, %v448
    %527 = vst.msk [vmem:[%s9 + $0x18] sm:$0xff] %vm131, %v463
    %528 = vst.msk [vmem:[%s9 + $0x20] sm:$0xff] %vm131, %v478
    %529 = vst.msk [vmem:[%s9 + $0x28] sm:$0xff] %vm131, %v493
    %530 = vst.msk [vmem:[%s9 + $0x30] sm:$0xff] %vm131, %v508
    %531 = vst.msk [vmem:[%s9 + $0x38] sm:$0xff] %vm131, %v523
    %532 = vrot.lane.b32.xlu0 %v65, 96
    %v533 = vpop.permute.xlu0 %532
    %v536 = vsel %vm131, %v418, 0
    %538 = vmatpush.msra.mxu0 0.0
    %539 = vmatpush.msra.mxu0 0.0
    %540 = vmatpush.msra.mxu0 0.0
    %541 = vmatpush.msra.mxu0 0.0
    %542 = vmatpush.msra.mxu0 0.0
    %543 = vmatpush.msra.mxu0 0.0
    %544 = vmatpush.msra.mxu0 0.0
    %545 = vmatpush.msra.mxu0 0.0
    %546 = vmatpush.msra.mxu0 0.0
    %547 = vmatpush.msra.mxu0 0.0
    %548 = vmatpush.msra.mxu0 0.0
    %549 = vmatpush.msra.mxu0 0.0
    %550 = vmatpush.msra.mxu0 0.0
    %551 = vmatpush.msra.mxu0 0.0
    %552 = vmatpush.msra.mxu0 0.0
    %553 = vmatpush.msra.mxu0 %v533
    %554 = vmatmul.f32.gmra.mxu0 %v536
    %v555 = vpop.f32.mrf.mxu0
    %v556 = vadd.f32 0.0, %v555
    %557 = vdwg.mxu0
    %558 = vrot.lane.b32.xlu0 %v120, 96
    %v559 = vpop.permute.xlu0 %558
    %v562 = vsel %vm131, %v433, 0
    %564 = vmatpush.msra.mxu0 0.0
    %565 = vmatpush.msra.mxu0 0.0
    %566 = vmatpush.msra.mxu0 0.0
    %567 = vmatpush.msra.mxu0 0.0
    %568 = vmatpush.msra.mxu0 0.0
    %569 = vmatpush.msra.mxu0 0.0
    %570 = vmatpush.msra.mxu0 0.0
    %571 = vmatpush.msra.mxu0 0.0
    %572 = vmatpush.msra.mxu0 0.0
    %573 = vmatpush.msra.mxu0 0.0
    %574 = vmatpush.msra.mxu0 0.0
    %575 = vmatpush.msra.mxu0 0.0
    %576 = vmatpush.msra.mxu0 0.0
    %577 = vmatpush.msra.mxu0 0.0
    %578 = vmatpush.msra.mxu0 0.0
    %579 = vmatpush.msra.mxu0 %v559
    %580 = vmatmul.f32.gmra.mxu0 %v562
    %v581 = vpop.f32.mrf.mxu0
    %v582 = vadd.f32 0.0, %v581
    %583 = vdwg.mxu0
    %584 = vrot.lane.b32.xlu0 %v124, 96
    %v585 = vpop.permute.xlu0 %584
    %v588 = vsel %vm131, %v448, 0
    %590 = vmatpush.msra.mxu0 0.0
    %591 = vmatpush.msra.mxu0 0.0
    %592 = vmatpush.msra.mxu0 0.0
    %593 = vmatpush.msra.mxu0 0.0
    %594 = vmatpush.msra.mxu0 0.0
    %595 = vmatpush.msra.mxu0 0.0
    %596 = vmatpush.msra.mxu0 0.0
    %597 = vmatpush.msra.mxu0 0.0
    %598 = vmatpush.msra.mxu0 0.0
    %599 = vmatpush.msra.mxu0 0.0
    %600 = vmatpush.msra.mxu0 0.0
    %601 = vmatpush.msra.mxu0 0.0
    %602 = vmatpush.msra.mxu0 0.0
    %603 = vmatpush.msra.mxu0 0.0
    %604 = vmatpush.msra.mxu0 0.0
    %605 = vmatpush.msra.mxu0 %v585
    %606 = vmatmul.f32.gmra.mxu0 %v588
    %v607 = vpop.f32.mrf.mxu0
    %v608 = vadd.f32 0.0, %v607
    %609 = vdwg.mxu0
    %610 = vrot.lane.b32.xlu0 %v128, 96
    %v611 = vpop.permute.xlu0 %610
    %v614 = vsel %vm131, %v463, 0
    %616 = vmatpush.msra.mxu0 0.0
    %617 = vmatpush.msra.mxu0 0.0
    %618 = vmatpush.msra.mxu0 0.0
    %619 = vmatpush.msra.mxu0 0.0
    %620 = vmatpush.msra.mxu0 0.0
    %621 = vmatpush.msra.mxu0 0.0
    %622 = vmatpush.msra.mxu0 0.0
    %623 = vmatpush.msra.mxu0 0.0
    %624 = vmatpush.msra.mxu0 0.0
    %625 = vmatpush.msra.mxu0 0.0
    %626 = vmatpush.msra.mxu0 0.0
    %627 = vmatpush.msra.mxu0 0.0
    %628 = vmatpush.msra.mxu0 0.0
    %629 = vmatpush.msra.mxu0 0.0
    %630 = vmatpush.msra.mxu0 0.0
    %631 = vmatpush.msra.mxu0 %v611
    %632 = vmatmul.f32.gmra.mxu0 %v614
    %v633 = vpop.f32.mrf.mxu0
    %v634 = vadd.f32 0.0, %v633
    %635 = vdwg.mxu0
    %636 = vrot.lane.b32.xlu0 %v68, 96
    %v637 = vpop.permute.xlu0 %636
    %v640 = vsel %vm131, %v478, 0
    %642 = vmatpush.msra.mxu0 0.0
    %643 = vmatpush.msra.mxu0 0.0
    %644 = vmatpush.msra.mxu0 0.0
    %645 = vmatpush.msra.mxu0 0.0
    %646 = vmatpush.msra.mxu0 0.0
    %647 = vmatpush.msra.mxu0 0.0
    %648 = vmatpush.msra.mxu0 0.0
    %649 = vmatpush.msra.mxu0 0.0
    %650 = vmatpush.msra.mxu0 0.0
    %651 = vmatpush.msra.mxu0 0.0
    %652 = vmatpush.msra.mxu0 0.0
    %653 = vmatpush.msra.mxu0 0.0
    %654 = vmatpush.msra.mxu0 0.0
    %655 = vmatpush.msra.mxu0 0.0
    %656 = vmatpush.msra.mxu0 0.0
    %657 = vmatpush.msra.mxu0 %v637
    %658 = vmatmul.f32.gmra.mxu0 %v640
    %v659 = vpop.f32.mrf.mxu0
    %v660 = vadd.f32 0.0, %v659
    %661 = vdwg.mxu0
    %662 = vrot.lane.b32.xlu0 %v122, 96
    %v663 = vpop.permute.xlu0 %662
    %v666 = vsel %vm131, %v493, 0
    %668 = vmatpush.msra.mxu0 0.0
    %669 = vmatpush.msra.mxu0 0.0
    %670 = vmatpush.msra.mxu0 0.0
    %671 = vmatpush.msra.mxu0 0.0
    %672 = vmatpush.msra.mxu0 0.0
    %673 = vmatpush.msra.mxu0 0.0
    %674 = vmatpush.msra.mxu0 0.0
    %675 = vmatpush.msra.mxu0 0.0
    %676 = vmatpush.msra.mxu0 0.0
    %677 = vmatpush.msra.mxu0 0.0
    %678 = vmatpush.msra.mxu0 0.0
    %679 = vmatpush.msra.mxu0 0.0
    %680 = vmatpush.msra.mxu0 0.0
    %681 = vmatpush.msra.mxu0 0.0
    %682 = vmatpush.msra.mxu0 0.0
    %683 = vmatpush.msra.mxu0 %v663
    %684 = vmatmul.f32.gmra.mxu0 %v666
    %v685 = vpop.f32.mrf.mxu0
    %v686 = vadd.f32 0.0, %v685
    %687 = vdwg.mxu0
    %688 = vrot.lane.b32.xlu0 %v126, 96
    %v689 = vpop.permute.xlu0 %688
    %v692 = vsel %vm131, %v508, 0
    %694 = vmatpush.msra.mxu0 0.0
    %695 = vmatpush.msra.mxu0 0.0
    %696 = vmatpush.msra.mxu0 0.0
    %697 = vmatpush.msra.mxu0 0.0
    %698 = vmatpush.msra.mxu0 0.0
    %699 = vmatpush.msra.mxu0 0.0
    %700 = vmatpush.msra.mxu0 0.0
    %701 = vmatpush.msra.mxu0 0.0
    %702 = vmatpush.msra.mxu0 0.0
    %703 = vmatpush.msra.mxu0 0.0
    %704 = vmatpush.msra.mxu0 0.0
    %705 = vmatpush.msra.mxu0 0.0
    %706 = vmatpush.msra.mxu0 0.0
    %707 = vmatpush.msra.mxu0 0.0
    %708 = vmatpush.msra.mxu0 0.0
    %709 = vmatpush.msra.mxu0 %v689
    %710 = vmatmul.f32.gmra.mxu0 %v692
    %v711 = vpop.f32.mrf.mxu0
    %v712 = vadd.f32 0.0, %v711
    %713 = vdwg.mxu0
    %714 = vrot.lane.b32.xlu0 %v130, 96
    %v715 = vpop.permute.xlu0 %714
    %v718 = vsel %vm131, %v523, 0
    %720 = vmatpush.msra.mxu0 0.0
    %721 = vmatpush.msra.mxu0 0.0
    %722 = vmatpush.msra.mxu0 0.0
    %723 = vmatpush.msra.mxu0 0.0
    %724 = vmatpush.msra.mxu0 0.0
    %725 = vmatpush.msra.mxu0 0.0
    %726 = vmatpush.msra.mxu0 0.0
    %727 = vmatpush.msra.mxu0 0.0
    %728 = vmatpush.msra.mxu0 0.0
    %729 = vmatpush.msra.mxu0 0.0
    %730 = vmatpush.msra.mxu0 0.0
    %731 = vmatpush.msra.mxu0 0.0
    %732 = vmatpush.msra.mxu0 0.0
    %733 = vmatpush.msra.mxu0 0.0
    %734 = vmatpush.msra.mxu0 0.0
    %735 = vmatpush.msra.mxu0 %v715
    %736 = vmatmul.f32.gmra.mxu0 %v718
    %v737 = vpop.f32.mrf.mxu0
    %v738 = vadd.f32 0.0, %v737
    %739 = vdwg.mxu0
    %742 = vrot.lane.b32.xlu0 %v582, 8
    %v743 = vpop.permute.xlu0 %742
    %744 = vrot.lane.b32.xlu0 %v686, 8
    %v745 = vpop.permute.xlu0 %744
    %750 = vrot.lane.b32.xlu0 %v608, 16
    %v751 = vpop.permute.xlu0 %750
    %752 = vrot.lane.b32.xlu0 %v712, 16
    %v753 = vpop.permute.xlu0 %752
    %758 = vrot.lane.b32.xlu0 %v634, 24
    %v759 = vpop.permute.xlu0 %758
    %760 = vrot.lane.b32.xlu0 %v738, 24
    %v761 = vpop.permute.xlu0 %760
    %v764 = vsel %vm131, %v556, %v743
    %v765 = vsel %vm131, %v660, %v745
    %vm766 = vcmask 130048
    %v767 = vsel %vm766, %v764, %v751
    %v768 = vsel %vm766, %v765, %v753
    %vm769 = vcmask 195584
    %v770 = vsel %vm769, %v767, %v759
    %v771 = vsel %vm769, %v768, %v761
    %v772 = vld [vmem:[%s4] sm:$0xff]
    %v773 = vld [vmem:[%s4 + $0x8] sm:$0xff]
    %v774 = vld [vmem:[%s4 + $0x10] sm:$0xff]
    %v775 = vld [vmem:[%s4 + $0x18] sm:$0xff]
    %v777 = vsel %vm40, %v770, 0
    %v780 = vsel %vm40, %v771, 0
    %782 = vmatpush.msra.mxu0 0.0
    %783 = vmatpush.msra.mxu0 0.0
    %784 = vmatpush.msra.mxu0 0.0
    %785 = vmatpush.msra.mxu0 0.0
    %786 = vmatpush.msra.mxu0 0.0
    %787 = vmatpush.msra.mxu0 0.0
    %788 = vmatpush.msra.mxu0 0.0
    %789 = vmatpush.msra.mxu0 0.0
    %790 = vmatpush.msra.mxu0 0.0
    %791 = vmatpush.msra.mxu0 0.0
    %792 = vmatpush.msra.mxu0 0.0
    %793 = vmatpush.msra.mxu0 0.0
    %794 = vmatpush.msra.mxu0 %v775
    %795 = vmatpush.msra.mxu0 %v774
    %796 = vmatpush.msra.mxu0 %v773
    %797 = vmatpush.msra.mxu0 %v772
    %798 = vmatmul.f32.gmra.mxu0 %v777
    %v799 = vpop.f32.mrf.mxu0
    %v800 = vadd.f32 0.0, %v799
    %801 = vmatmul.f32.gmra.mxu0 %v780
    %v802 = vpop.f32.mrf.mxu0
    %v803 = vadd.f32 0.0, %v802
    %804 = vdwg.mxu0
    %807 = vrot.lane.b32.xlu0 %v800, 32
    %v808 = vpop.permute.xlu0 %807
    %809 = vrot.lane.b32.xlu0 %v803, 32
    %v810 = vpop.permute.xlu0 %809
    %v813 = vadd.f32 %v98, %v808
    %v814 = vadd.f32 %v101, %v810
    %v815 = vld [vmem:[%s5] sm:$0x1]
    %v817 = vperm.slane %v815, 0
    %818 = vrot.lane.b32.xlu0 %v817, 32
    %v819 = vpop.permute.xlu0 %818
    %v821 = vadd.f32 %v813, %v819
    %v822 = vadd.f32 %v814, %v819
    %823 = vrot.lane.b32.xlu0 %v34, 32
    %v824 = vpop.permute.xlu0 %823
    %825 = vrot.lane.b32.xlu0 %v35, 32
    %v826 = vpop.permute.xlu0 %825
    %v829 = vadd.f32 %v821, %v824
    %v830 = vadd.f32 %v822, %v826
    %833 = vrot.lane.b32.xlu0 %v829, 96
    %v834 = vpop.permute.xlu0 %833
    %835 = vrot.lane.b32.xlu0 %v830, 96
    %v836 = vpop.permute.xlu0 %835
    %v839 = vsel %vm40, %v834, 0.0
    %840 = vadd.xlane.f32.xlu0 %v839
    %v841 = vpop.xlane.xlu0 %840
    %v842 = vsel %vm40, %v836, 0.0
    %843 = vadd.xlane.f32.xlu0 %v842
    %v844 = vpop.xlane.xlu0 %843
    %v845 = vrcp.pop 32.0
    %v846 = vmul.f32 32.0, %v845
    %v847 = vsub.f32 1.0, %v846
    %v848 = vmul.f32 %v845, %v847
    %v849 = vadd.f32 %v845, %v848
    %vm850 = vweird.f32 %v845
    %v851 = vsel %vm850, %v845, %v849
    %v852 = vmul.f32 %v841, %v851
    %v853 = vmul.f32 %v844, %v851
    %v854 = vsub.f32 %v829, %v852
    %v855 = vsub.f32 %v830, %v853
    %v856 = vmul.f32 %v854, %v854
    %v857 = vmul.f32 %v855, %v855
    %860 = vrot.lane.b32.xlu0 %v856, 96
    %v861 = vpop.permute.xlu0 %860
    %862 = vrot.lane.b32.xlu0 %v857, 96
    %v863 = vpop.permute.xlu0 %862
    %v866 = vsel %vm40, %v861, 0.0
    %867 = vadd.xlane.f32.xlu0 %v866
    %v868 = vpop.xlane.xlu0 %867
    %v869 = vsel %vm40, %v863, 0.0
    %870 = vadd.xlane.f32.xlu0 %v869
    %v871 = vpop.xlane.xlu0 %870
    %v872 = vmul.f32 %v868, %v851
    %v873 = vmul.f32 %v871, %v851
    %v874 = vadd.f32 %v872, 1e-05
    %v875 = vadd.f32 %v873, 1e-05
    %v876 = vrsqrt.pop %v874
    %v877 = vmul.f32 %v876, %v874
    %v878 = vmul.f32 %v877, %v876
    %v879 = vmul.f32 0.5, %v878
    %v880 = vsub.f32 1.5, %v879
    %v881 = vmul.f32 %v876, %v880
    %vm882 = vweird.f32 %v874
    %vm883 = vweird.f32 %v876
    %vm884 = vmor %vm882, %vm883
    %v885 = vsel %vm884, %v876, %v881
    %v886 = vrsqrt.pop %v875
    %v887 = vmul.f32 %v886, %v875
    %v888 = vmul.f32 %v887, %v886
    %v889 = vmul.f32 0.5, %v888
    %v890 = vsub.f32 1.5, %v889
    %v891 = vmul.f32 %v886, %v890
    %vm892 = vweird.f32 %v875
    %vm893 = vweird.f32 %v886
    %vm894 = vmor %vm892, %vm893
    %v895 = vsel %vm894, %v886, %v891
    %v896 = vmul.f32 %v854, %v885
    %v897 = vmul.f32 %v855, %v895
    %v898 = vld [vmem:[%s6] sm:$0x1]
    %v900 = vperm.slane %v898, 0
    %901 = vrot.lane.b32.xlu0 %v900, 32
    %v902 = vpop.permute.xlu0 %901
    %v904 = vmul.f32 %v896, %v902
    %v905 = vmul.f32 %v897, %v902
    %v906 = vld [vmem:[%s7] sm:$0x1]
    %v908 = vperm.slane %v906, 0
    %909 = vrot.lane.b32.xlu0 %v908, 32
    %v910 = vpop.permute.xlu0 %909
    %v912 = vadd.f32 %v904, %v910
    %v913 = vadd.f32 %v905, %v910
    %916 = vrot.lane.b32.xlu0 %v912, 96
    %v917 = vpop.permute.xlu0 %916
    %918 = vrot.lane.b32.xlu0 %v913, 96
    %v919 = vpop.permute.xlu0 %918
    %922 = vst.msk [vmem:[#allocation2] sm:$0xff] %vm40, %v917
    %923 = vst.msk [vmem:[#allocation2 + $0x8] sm:$0xff] %vm40, %v919
    // Predicated region
    $region34: #{attention_forward.1} parent=1 // pred_check
      _
    $region35: #{attention_forward.1} parent=1 // pred_check_branch
      %925 = sbr.rel (0) target = $region37
    $region36: #{attention_forward.1} parent=1 // pred_region
      %927 = vsyncadd [#allocation3], 0
      %s928 = sshll.u32 [#allocation2], 4
      %s929 = int_to_ptr.vmem [resolvable:$true] %s928
      %s930 = sshll.u32 %s8, 4
      %s931 = int_to_ptr.hbm [resolvable:$true] %s930
      %936 = dma.vmem_to_hbm [thread:$0]  %s929, 256, %s931, [#allocation3], 128, 128, 8
    $region37: #{attention_forward.1} parent=1 // pred_fallthru
      _
    // Predicated region
    $region38: #{attention_forward.1} parent=1 // pred_check
      _
    $region39: #{attention_forward.1} parent=1 // pred_check_branch
      %938 = sbr.rel (0) target = $region41
    $region40: #{attention_forward.1} parent=1 // pred_region
      _
    $region41: #{attention_forward.1} parent=1 // pred_fallthru
      _
    // Predicated region
    $region42: #{attention_forward.1} parent=1 // pred_check
      _
    $region43: #{attention_forward.1} parent=1 // pred_check_branch
      %940 = sbr.rel (0) target = $region45
    $region44: #{attention_forward.1} parent=1 // pred_region
      %942 = dma.done [#allocation3], 256
    $region45: #{attention_forward.1} parent=1 // pred_fallthru
      _
    // Predicated region
    $region46: #{attention_forward.1} parent=1 // pred_check
      _
    $region47: #{attention_forward.1} parent=1 // pred_check_branch
      %944 = sbr.rel (0) target = $region49
    $region48: #{attention_forward.1} parent=1 // pred_region
      _
    $region49: #{attention_forward.1} parent=1 // pred_fallthru
      _
    %945 = vsyncpa [#allocation3], 1

</llo_original>
